<compile_context>
chip_gen: v5e
topology: v5e:2x2
jax: 0.10.0
libtpu: 0.0.40
codegen_flags: <defaults>
</compile_context>

<pallas_src>
import functools

import jax
import jax.numpy as jnp
from jax import lax
from jax.experimental import pallas as pl
from jax.experimental.pallas import tpu as pltpu


def _round_up(x, m):
    return (x + m - 1) // m * m


def _head_kernel(x_ref, w1_ref, b1_ref, w2_ref, b2_ref, o_ref):
    # x_ref:  [tb, H]   CLS-token features (dropout is identity at inference)
    # w1_ref: [H, H]    dense weight, [out, in] layout, bf16
    # b1_ref: [1, H]    dense bias, f32
    # w2_ref: [Cp, H]   out_proj weight, [out, in] layout, zero-padded, bf16
    # b2_ref: [1, Cp]   out_proj bias, zero-padded, f32
    # o_ref:  [tb, Cp]  logits, f32, lane-dense (Cp multiple of 128)
    x = x_ref[...].astype(jnp.bfloat16)

    # dense: x @ W1.T + b1 -- contract on axis 1 of both operands (no transpose
    # needed); bf16 operands, f32 accumulation on the MXU.
    h = lax.dot_general(
        x, w1_ref[...],
        dimension_numbers=(((1,), (1,)), ((), ())),
        preferred_element_type=jnp.float32,
    ) + b1_ref[...]
    h = jnp.tanh(h)

    # TODO(synk): training-mode dropout (pltpu.prng_random_bits masking) is
    # intentionally omitted; eval-mode dropout is the identity.

    # out_proj: h @ W2.T + b2 -- padded N dim => lane-dense MXU and store.
    out = lax.dot_general(
        h.astype(jnp.bfloat16), w2_ref[...],
        dimension_numbers=(((1,), (1,)), ((), ())),
        preferred_element_type=jnp.float32,
    ) + b2_ref[...]
    o_ref[...] = out.astype(o_ref.dtype)


def prepare_head_params(w_dense, b_dense, w_out, b_out,
                        compute_dtype=jnp.bfloat16):
    """One-time ("model load") parameter prep: bf16 cast + class-dim lane padding.

    Keeps torch.nn.Linear's [out_features, in_features] layout (no transpose,
    neither here nor per call).
    """
    H = w_dense.shape[0]
    C = w_out.shape[0]
    Cp = _round_up(C, 128)

    w1 = w_dense.astype(compute_dtype)                              # [H, H]
    b1 = b_dense.astype(jnp.float32).reshape(1, H)                  # [1, H]
    w2 = jnp.zeros((Cp, H), compute_dtype).at[:C, :].set(
        w_out.astype(compute_dtype))                                # [Cp, H]
    b2 = jnp.zeros((1, Cp), jnp.float32).at[0, :C].set(
        b_out.astype(jnp.float32))                                  # [1, Cp]
    return w1, b1, w2, b2


@functools.partial(jax.jit, static_argnames=("num_classes", "tb"))
def roberta_classification_head(features, w1, b1, w2, b2, *, num_classes,
                                tb=256):
    """features: [B, S, H].  Returns logits [B, num_classes] (float32)."""
    B, S, H = features.shape
    Cp = w2.shape[0]

    # Batch tile: multiple of 8 sublanes (or the full batch if smaller).
    tb = min(tb, B)
    if tb < B:
        tb = max(8, (tb // 8) * 8)
    nb = pl.cdiv(B, tb)

    # CLS-token slice via the BlockSpec: view features as [B, S*H]; the x block
    # covers columns [0:H] only, so the DMA reads exactly the CLS rows and no
    # [B, H] intermediate is ever materialized in HBM.
    if H % 128 == 0:
        x2d = features.reshape(B, S * H)
    else:
        # Fallback for lane-unaligned hidden sizes (not the RoBERTa case).
        x2d = features[:, 0, :]
    x_spec = pl.BlockSpec((tb, H), lambda i: (i, 0))

    logits_padded = pl.pallas_call(
        _head_kernel,
        out_shape=jax.ShapeDtypeStruct((B, Cp), jnp.float32),
        grid=(nb,),
        in_specs=[
            x_spec,
            pl.BlockSpec((H, H), lambda i: (0, 0)),    # dense W  (VMEM-resident)
            pl.BlockSpec((1, H), lambda i: (0, 0)),    # dense b
            pl.BlockSpec((Cp, H), lambda i: (0, 0)),   # out_proj W (padded)
            pl.BlockSpec((1, Cp), lambda i: (0, 0)),   # out_proj b (padded)
        ],
        out_specs=pl.BlockSpec((tb, Cp), lambda i: (i, 0)),
        compiler_params=pltpu.CompilerParams(
            dimension_semantics=("parallel",)),
    )(x2d, w1, b1, w2, b2)

    return logits_padded[:, :num_classes]


def _init_linear(key, out_features, in_features):
    """Deterministic init mirroring torch.nn.Linear defaults (uniform +/-1/sqrt(fan_in))."""
    kw, kb = jax.random.split(key)
    bound = 1.0 / (in_features ** 0.5)
    w = jax.random.uniform(kw, (out_features, in_features), jnp.float32,
                           minval=-bound, maxval=bound)
    b = jax.random.uniform(kb, (out_features,), jnp.float32,
                           minval=-bound, maxval=bound)
    return w, b


if __name__ == "__main__":
    # Small but TPU-representative shapes: batch=32, seq=8, hidden=128, classes=4.
    B, S, H, C = 32, 8, 128, 4

    key = jax.random.PRNGKey(0)
    k_feat, k_dense, k_out = jax.random.split(key, 3)

    features = jax.random.normal(k_feat, (B, S, H), jnp.float32)
    w_dense, b_dense = _init_linear(k_dense, H, H)   # dense: Linear(H, H)
    w_out, b_out = _init_linear(k_out, C, H)         # out_proj: Linear(H, C)

    # One-time parameter prep (bf16 cast + class-dim padding).
    w1, b1, w2, b2 = prepare_head_params(w_dense, b_dense, w_out, b_out)

    # tb=8 so the tiny demo batch still exercises a multi-step grid=(4,)
    # pipelined call with VMEM-resident weights.
    logits = roberta_classification_head(features, w1, b1, w2, b2,
                                         num_classes=C, tb=8)
    logits = jax.block_until_ready(logits)

    # Pure-JAX f32 reference (PyTorch eval-mode semantics).  Loose tolerance
    # because the kernel uses bf16 matmul operands (f32 accumulation).
    x_ref = features[:, 0, :]
    ref = jnp.tanh(x_ref @ w_dense.T + b_dense) @ w_out.T + b_out
    assert logits.shape == (B, C)
    assert logits.dtype == jnp.float32
    assert jnp.allclose(logits, ref, atol=2e-2, rtol=2e-2), \
        float(jnp.max(jnp.abs(logits - ref)))

    print("KERNEL_OK")
</pallas_src>

<mosaic_0001>
module attributes {stable_mosaic.version = 11 : i64} {
  func.func @_head_kernel(%arg0: i32, %arg1: memref<8x128xf32, #tpu.memory_space<vmem>>, %arg2: memref<128x128xbf16, #tpu.memory_space<vmem>>, %arg3: memref<1x128xf32, #tpu.memory_space<vmem>>, %arg4: memref<128x128xbf16, #tpu.memory_space<vmem>>, %arg5: memref<1x128xf32, #tpu.memory_space<vmem>>, %arg6: memref<8x128xf32, #tpu.memory_space<vmem>>) attributes {dimension_semantics = [#tpu.dimension_semantics<parallel>], iteration_bounds = array<i64: 4>, scalar_prefetch = 0 : i64, scratch_operands = 0 : i64, tpu.core_type = #tpu.core_type<tc>, window_params = [{transform_indices = @transform_0, window_bounds = array<i64: 8, 128>}, {pipeline_mode = #tpu.pipeline_mode<synchronous>, transform_indices = @transform_1, window_bounds = array<i64: 128, 128>}, {pipeline_mode = #tpu.pipeline_mode<synchronous>, transform_indices = @transform_2, window_bounds = array<i64: 1, 128>}, {pipeline_mode = #tpu.pipeline_mode<synchronous>, transform_indices = @transform_3, window_bounds = array<i64: 128, 128>}, {pipeline_mode = #tpu.pipeline_mode<synchronous>, transform_indices = @transform_4, window_bounds = array<i64: 1, 128>}, {transform_indices = @transform_5, window_bounds = array<i64: 8, 128>}]} {
    %c0 = arith.constant 0 : index
    %c0_0 = arith.constant 0 : index
    %0 = vector.load %arg1[%c0, %c0_0] : memref<8x128xf32, #tpu.memory_space<vmem>>, vector<8x128xf32>
    %1 = arith.truncf %0 : vector<8x128xf32> to vector<8x128xbf16>
    %c0_1 = arith.constant 0 : index
    %c0_2 = arith.constant 0 : index
    %2 = vector.load %arg2[%c0_1, %c0_2] : memref<128x128xbf16, #tpu.memory_space<vmem>>, vector<128x128xbf16>
    %cst = arith.constant dense<0.000000e+00> : vector<8x128xf32>
    %3 = tpu.matmul %1, %2, %cst {dimension_numbers = #tpu.dot_dimension_numbers<[1], [1], [0], [0], [0, 0, 1, 0], [], []>} : vector<8x128xbf16>, vector<128x128xbf16>, vector<8x128xf32> -> vector<8x128xf32>
    %c0_3 = arith.constant 0 : index
    %c0_4 = arith.constant 0 : index
    %4 = vector.load %arg3[%c0_3, %c0_4] : memref<1x128xf32, #tpu.memory_space<vmem>>, vector<1x128xf32>
    %5 = vector.broadcast %4 : vector<1x128xf32> to vector<8x128xf32>
    %6 = arith.addf %3, %5 : vector<8x128xf32>
    %7 = math.tanh %6 : vector<8x128xf32>
    %8 = arith.truncf %7 : vector<8x128xf32> to vector<8x128xbf16>
    %c0_5 = arith.constant 0 : index
    %c0_6 = arith.constant 0 : index
    %9 = vector.load %arg4[%c0_5, %c0_6] : memref<128x128xbf16, #tpu.memory_space<vmem>>, vector<128x128xbf16>
    %cst_7 = arith.constant dense<0.000000e+00> : vector<8x128xf32>
    %10 = tpu.matmul %8, %9, %cst_7 {dimension_numbers = #tpu.dot_dimension_numbers<[1], [1], [0], [0], [0, 0, 1, 0], [], []>} : vector<8x128xbf16>, vector<128x128xbf16>, vector<8x128xf32> -> vector<8x128xf32>
    %c0_8 = arith.constant 0 : index
    %c0_9 = arith.constant 0 : index
    %11 = vector.load %arg5[%c0_8, %c0_9] : memref<1x128xf32, #tpu.memory_space<vmem>>, vector<1x128xf32>
    %12 = vector.broadcast %11 : vector<1x128xf32> to vector<8x128xf32>
    %13 = arith.addf %10, %12 : vector<8x128xf32>
    %c0_10 = arith.constant 0 : index
    %c0_11 = arith.constant 0 : index
    %14 = vector.load %arg6[%c0_10, %c0_11] : memref<8x128xf32, #tpu.memory_space<vmem>>, vector<8x128xf32>
    tpu.vector_store %arg6[%c0_10, %c0_11], %13 {strides = array<i32>} : memref<8x128xf32, #tpu.memory_space<vmem>>, vector<8x128xf32>,
    return
  }
  func.func @transform_0(%arg0: i32) -> (i32, i32) {
    %c0_i32 = arith.constant 0 : i32
    %c0_i32_0 = arith.constant 0 : i32
    return %arg0, %c0_i32 : i32, i32
  }
  func.func @transform_1(%arg0: i32) -> (i32, i32) {
    %c0_i32 = arith.constant 0 : i32
    %c0_i32_0 = arith.constant 0 : i32
    %c0_i32_1 = arith.constant 0 : i32
    return %c0_i32, %c0_i32_0 : i32, i32
  }
  func.func @transform_2(%arg0: i32) -> (i32, i32) {
    %c0_i32 = arith.constant 0 : i32
    %c0_i32_0 = arith.constant 0 : i32
    %c0_i32_1 = arith.constant 0 : i32
    return %c0_i32, %c0_i32_0 : i32, i32
  }
  func.func @transform_3(%arg0: i32) -> (i32, i32) {
    %c0_i32 = arith.constant 0 : i32
    %c0_i32_0 = arith.constant 0 : i32
    %c0_i32_1 = arith.constant 0 : i32
    return %c0_i32, %c0_i32_0 : i32, i32
  }
  func.func @transform_4(%arg0: i32) -> (i32, i32) {
    %c0_i32 = arith.constant 0 : i32
    %c0_i32_0 = arith.constant 0 : i32
    %c0_i32_1 = arith.constant 0 : i32
    return %c0_i32, %c0_i32_0 : i32, i32
  }
  func.func @transform_5(%arg0: i32) -> (i32, i32) {
    %c0_i32 = arith.constant 0 : i32
    %c0_i32_0 = arith.constant 0 : i32
    return %arg0, %c0_i32 : i32, i32
  }
}

</mosaic_0001>

<llo_original>
// kernel: roberta_classification_head.1
$region0: #{roberta_classification_head.1}
  #allocation0 [shape = 'u32[]', space=smem, size = 0x4, offset = 0x4, fixed_abs, tag = 'smem constant byte address 0x4 - core index']
  #allocation1 [shape = 'u32[72,128]{1,0:T(1,128)}', space=vmem, size = 0x9000, scoped, tag = 'internal scratch']
  %s0 = inlined_call_operand.vmem [shape: f32[32,1024], index: 0, kind: input, shape index: {}]
  %s1 = inlined_call_operand.vmem [shape: bf16[128,128], index: 1, kind: input, shape index: {}]
  %s2 = inlined_call_operand.vmem [shape: f32[1,128], index: 2, kind: input, shape index: {}]
  %s3 = inlined_call_operand.vmem [shape: bf16[128,128], index: 3, kind: input, shape index: {}]
  %s4 = inlined_call_operand.vmem [shape: f32[1,128], index: 4, kind: input, shape index: {}]
  %s5 = inlined_call_operand.vmem [shape: f32[32,128], index: 5, kind: output, shape index: {}]
  %s6 = sld [smem:[#allocation0]]
  $region53: #{roberta_classification_head.1} parent=0
    _
  %s8 = ssub.s32 1, %s6
  %s9 = scalar_select 0, %s8, %s6
  loop: start=0, step=1, limit=6
  $region2: #{roberta_classification_head.1} parent=0 // loop_pre_header
    _
  $region3: #{roberta_classification_head.1} parent=0 // loop_header
    %s11 = sphi 0, %s15
    %p12 = scmp.ge.s32.totalorder %s11, 6
    %s21 = sphi 0, %s23
    %s24 = sphi 0, %s21
    %s25 = sphi 0, %s24
    %s41 = sphi 0, %s25
    %s45 = sphi 0, %s45
    %s47 = sphi 0, %s45
    %s48 = sphi 0, %s47
    %s62 = sphi 0, %s48
    %s66 = sphi 0, %s66
    %s68 = sphi 0, %s66
    %s69 = sphi 0, %s68
    %s83 = sphi 0, %s69
    %s87 = sphi 0, %s87
    %s89 = sphi 0, %s87
    %s90 = sphi 0, %s89
    %s104 = sphi 0, %s90
    %s108 = sphi 0, %s108
    %s110 = sphi 0, %s108
    %s111 = sphi 0, %s110
    %s125 = sphi 0, %s111
    %s131 = sphi 0, %s133
    %s134 = sphi 0, %s131
    %s135 = sphi 0, %s134
    %s151 = sphi 0, %s135
  $region4: #{roberta_classification_head.1} parent=0 // loop_header_branch
    %14 = sbr.rel (%p12) target = $region8
  $region5: #{roberta_classification_head.1} parent=0 // loop_body
    %s16 = ssub.s32 %s11, 1
    %s17 = ssub.s32 %s11, 2
    %s18 = sadd.s32 %s11, 1
    %s19 = ssub.s32 %s11, %s18
    %p20 = scmp.eq.s32.totalorder %s19, 0
    %s22 = sadd.s32 %s21, 1
    %s23 = scalar_select %p20, %s21, %s22
    %p26 = pneg %p20
    %p27 = scmp.eq.s32.totalorder %s11, 3
    %p28 = por %p26, %p27
    %p29 = scmp.ne.s32.totalorder %s21, %s24
    %p30 = scmp.eq.s32.totalorder %s11, 0
    %p31 = por %p29, %p30
    %p32 = scmp.ne.s32.totalorder %s21, %s24
    %p33 = scmp.eq.s32.totalorder %s16, 3
    %p34 = por %p32, %p33
    %p35 = scmp.ne.s32.totalorder %s24, %s25
    %p36 = scmp.eq.s32.totalorder %s16, 0
    %p37 = por %p35, %p36
    %p38 = scmp.ne.s32.totalorder %s24, %s25
    %p39 = scmp.eq.s32.totalorder %s17, 3
    %p40 = por %p38, %p39
    %p42 = scmp.ne.s32.totalorder %s25, %s41
    %p43 = scmp.eq.s32.totalorder %s17, 0
    %p44 = por %p42, %p43
    %s46 = sadd.s32 %s45, 1
    %p49 = scmp.eq.s32.totalorder %s11, 3
    %p50 = scmp.ne.s32.totalorder %s45, %s47
    %p51 = scmp.eq.s32.totalorder %s11, 0
    %p52 = por %p50, %p51
    %p53 = scmp.ne.s32.totalorder %s45, %s47
    %p54 = scmp.eq.s32.totalorder %s16, 3
    %p55 = por %p53, %p54
    %p56 = scmp.ne.s32.totalorder %s47, %s48
    %p57 = scmp.eq.s32.totalorder %s16, 0
    %p58 = por %p56, %p57
    %p59 = scmp.ne.s32.totalorder %s47, %s48
    %p60 = scmp.eq.s32.totalorder %s17, 3
    %p61 = por %p59, %p60
    %p63 = scmp.ne.s32.totalorder %s48, %s62
    %p64 = scmp.eq.s32.totalorder %s17, 0
    %p65 = por %p63, %p64
    %s67 = sadd.s32 %s66, 1
    %p70 = scmp.eq.s32.totalorder %s11, 3
    %p71 = scmp.ne.s32.totalorder %s66, %s68
    %p72 = scmp.eq.s32.totalorder %s11, 0
    %p73 = por %p71, %p72
    %p74 = scmp.ne.s32.totalorder %s66, %s68
    %p75 = scmp.eq.s32.totalorder %s16, 3
    %p76 = por %p74, %p75
    %p77 = scmp.ne.s32.totalorder %s68, %s69
    %p78 = scmp.eq.s32.totalorder %s16, 0
    %p79 = por %p77, %p78
    %p80 = scmp.ne.s32.totalorder %s68, %s69
    %p81 = scmp.eq.s32.totalorder %s17, 3
    %p82 = por %p80, %p81
    %p84 = scmp.ne.s32.totalorder %s69, %s83
    %p85 = scmp.eq.s32.totalorder %s17, 0
    %p86 = por %p84, %p85
    %s88 = sadd.s32 %s87, 1
    %p91 = scmp.eq.s32.totalorder %s11, 3
    %p92 = scmp.ne.s32.totalorder %s87, %s89
    %p93 = scmp.eq.s32.totalorder %s11, 0
    %p94 = por %p92, %p93
    %p95 = scmp.ne.s32.totalorder %s87, %s89
    %p96 = scmp.eq.s32.totalorder %s16, 3
    %p97 = por %p95, %p96
    %p98 = scmp.ne.s32.totalorder %s89, %s90
    %p99 = scmp.eq.s32.totalorder %s16, 0
    %p100 = por %p98, %p99
    %p101 = scmp.ne.s32.totalorder %s89, %s90
    %p102 = scmp.eq.s32.totalorder %s17, 3
    %p103 = por %p101, %p102
    %p105 = scmp.ne.s32.totalorder %s90, %s104
    %p106 = scmp.eq.s32.totalorder %s17, 0
    %p107 = por %p105, %p106
    %s109 = sadd.s32 %s108, 1
    %p112 = scmp.eq.s32.totalorder %s11, 3
    %p113 = scmp.ne.s32.totalorder %s108, %s110
    %p114 = scmp.eq.s32.totalorder %s11, 0
    %p115 = por %p113, %p114
    %p116 = scmp.ne.s32.totalorder %s108, %s110
    %p117 = scmp.eq.s32.totalorder %s16, 3
    %p118 = por %p116, %p117
    %p119 = scmp.ne.s32.totalorder %s110, %s111
    %p120 = scmp.eq.s32.totalorder %s16, 0
    %p121 = por %p119, %p120
    %p122 = scmp.ne.s32.totalorder %s110, %s111
    %p123 = scmp.eq.s32.totalorder %s17, 3
    %p124 = por %p122, %p123
    %p126 = scmp.ne.s32.totalorder %s111, %s125
    %p127 = scmp.eq.s32.totalorder %s17, 0
    %p128 = por %p126, %p127
    %s129 = ssub.s32 %s11, %s18
    %p130 = scmp.eq.s32.totalorder %s129, 0
    %s132 = sadd.s32 %s131, 1
    %s133 = scalar_select %p130, %s131, %s132
    %p136 = pneg %p130
    %p137 = scmp.eq.s32.totalorder %s11, 3
    %p138 = por %p136, %p137
    %p139 = scmp.ne.s32.totalorder %s131, %s134
    %p140 = scmp.eq.s32.totalorder %s11, 0
    %p141 = por %p139, %p140
    %p142 = scmp.ne.s32.totalorder %s131, %s134
    %p143 = scmp.eq.s32.totalorder %s16, 3
    %p144 = por %p142, %p143
    %p145 = scmp.ne.s32.totalorder %s134, %s135
    %p146 = scmp.eq.s32.totalorder %s16, 0
    %p147 = por %p145, %p146
    %p148 = scmp.ne.s32.totalorder %s134, %s135
    %p149 = scmp.eq.s32.totalorder %s17, 3
    %p150 = por %p148, %p149
    %p152 = scmp.ne.s32.totalorder %s135, %s151
    %p153 = scmp.eq.s32.totalorder %s17, 0
    %p154 = por %p152, %p153
    %p155 = scmp.le.s32.totalorder 1, %s11
    %p156 = scmp.lt.s32.totalorder %s11, 5
    %p157 = pnand %p155, %p156
    %p158 = pneg %p157
    // Predicated region
    $region9: #{roberta_classification_head.1} parent=5 // pred_check
      _
    $region10: #{roberta_classification_head.1} parent=5 // pred_check_branch
      %160 = sbr.rel (%p157) target = $region12
    $region11: #{roberta_classification_head.1} parent=5 // pred_region
      %s161 = ssub.s32 %s11, 1
      // Predicated region
      $region13: #{roberta_classification_head.1} parent=11 // pred_check
        %p162 = pneg %p58
      $region14: #{roberta_classification_head.1} parent=11 // pred_check_branch
        %164 = sbr.rel (%p162) target = $region16
      $region15: #{roberta_classification_head.1} parent=11 // pred_region
        _
      $region16: #{roberta_classification_head.1} parent=11 // pred_fallthru
        _
      // Predicated region
      $region17: #{roberta_classification_head.1} parent=11 // pred_check
        %p165 = pneg %p79
      $region18: #{roberta_classification_head.1} parent=11 // pred_check_branch
        %167 = sbr.rel (%p165) target = $region20
      $region19: #{roberta_classification_head.1} parent=11 // pred_region
        _
      $region20: #{roberta_classification_head.1} parent=11 // pred_fallthru
        _
      // Predicated region
      $region21: #{roberta_classification_head.1} parent=11 // pred_check
        %p168 = pneg %p100
      $region22: #{roberta_classification_head.1} parent=11 // pred_check_branch
        %170 = sbr.rel (%p168) target = $region24
      $region23: #{roberta_classification_head.1} parent=11 // pred_region
        _
      $region24: #{roberta_classification_head.1} parent=11 // pred_fallthru
        _
      // Predicated region
      $region25: #{roberta_classification_head.1} parent=11 // pred_check
        %p171 = pneg %p121
      $region26: #{roberta_classification_head.1} parent=11 // pred_check_branch
        %173 = sbr.rel (%p171) target = $region28
      $region27: #{roberta_classification_head.1} parent=11 // pred_region
        _
      $region28: #{roberta_classification_head.1} parent=11 // pred_fallthru
        _
    $region12: #{roberta_classification_head.1} parent=5 // pred_fallthru
      _
    %p174 = scmp.lt.s32.totalorder %s11, 4
    // Predicated region
    $region29: #{roberta_classification_head.1} parent=5 // pred_check
      %p175 = pneg %p174
    $region30: #{roberta_classification_head.1} parent=5 // pred_check_branch
      %177 = sbr.rel (%p175) target = $region32
    $region31: #{roberta_classification_head.1} parent=5 // pred_region
      // Predicated region
      $region33: #{roberta_classification_head.1} parent=31 // pred_check
        %p178 = pneg %p31
      $region34: #{roberta_classification_head.1} parent=31 // pred_check_branch
        %180 = sbr.rel (%p178) target = $region36
      $region35: #{roberta_classification_head.1} parent=31 // pred_region
        %p181 = scmp.lt.s32.totalorder %s11, 3
        %s182 = scalar_select %p181, %s11, 3
        %s183 = smul.addr %s182, 8
        %s184 = smul.addr %s183, 8
        %s185 = scalar_lea.vmem %s0, %s184
      $region36: #{roberta_classification_head.1} parent=31 // pred_fallthru
        _
    $region32: #{roberta_classification_head.1} parent=5 // pred_fallthru
      _
    %p186 = scmp.le.s32.totalorder 1, %s11
    %p187 = scmp.lt.s32.totalorder %s11, 5
    %p188 = pnand %p186, %p187
    %p189 = pneg %p188
    // Predicated region
    $region37: #{roberta_classification_head.1} parent=5 // pred_check
      _
    $region38: #{roberta_classification_head.1} parent=5 // pred_check_branch
      %191 = sbr.rel (%p188) target = $region40
    $region39: #{roberta_classification_head.1} parent=5 // pred_region
      %s192 = ssub.s32 %s11, 1
      %p193 = scmp.lt.s32.totalorder %s16, 3
      %s194 = scalar_select %p193, %s16, 3
      %s195 = smul.addr %s194, 8
      %s196 = smul.addr %s195, 8
      %s197 = scalar_lea.vmem %s0, %s196
      %p198 = pneg %p37
      %p199 = pneg %p34
      %p200 = pneg %p58
      %p201 = pneg %p55
      %p202 = pneg %p79
      %p203 = pneg %p76
      %p204 = pneg %p100
      %p205 = pneg %p97
      %p206 = pneg %p121
      %p207 = pneg %p118
      %p208 = pneg %p147
      %p209 = pneg %p144
      %p210 = scmp.lt.s32.totalorder %s16, 3
      %s211 = scalar_select %p210, %s16, 3
      %s212 = smul.addr %s211, 8
      %s213 = scalar_lea.vmem %s5, %s212
      %p214 = scmp.lt.s32.totalorder %s16, 3
      %s215 = scalar_select %p214, %s16, 3
      %s216 = smul.addr %s215, 8
      %s217 = smul.addr %s216, 8
      %s218 = scalar_lea.vmem %s0, %s217
      %p219 = scmp.lt.s32.totalorder %s16, 3
      %s220 = scalar_select %p219, %s16, 3
      %s221 = smul.addr %s220, 8
      %s222 = scalar_lea.vmem %s5, %s221
      %v223 = vld [vmem:[%s218] sm:$0xff]
      %v224 = vpack.c.bf16 %v223, %v223
      %v225 = vld [vmem:[%s1] sm:$0xf]
      %v226 = vld [vmem:[%s1 + $0x4] sm:$0xf]
      %v227 = vld [vmem:[%s1 + $0x8] sm:$0xf]
      %v228 = vld [vmem:[%s1 + $0xc] sm:$0xf]
      %v229 = vld [vmem:[%s1 + $0x10] sm:$0xf]
      %v230 = vld [vmem:[%s1 + $0x14] sm:$0xf]
      %v231 = vld [vmem:[%s1 + $0x18] sm:$0xf]
      %v232 = vld [vmem:[%s1 + $0x1c] sm:$0xf]
      %v233 = vld [vmem:[%s1 + $0x20] sm:$0xf]
      %v234 = vld [vmem:[%s1 + $0x24] sm:$0xf]
      %v235 = vld [vmem:[%s1 + $0x28] sm:$0xf]
      %v236 = vld [vmem:[%s1 + $0x2c] sm:$0xf]
      %v237 = vld [vmem:[%s1 + $0x30] sm:$0xf]
      %v238 = vld [vmem:[%s1 + $0x34] sm:$0xf]
      %v239 = vld [vmem:[%s1 + $0x38] sm:$0xf]
      %v240 = vld [vmem:[%s1 + $0x3c] sm:$0xf]
      %v241 = vld [vmem:[%s2] sm:$0x1]
      %v243 = vperm.slane %v241, 0
      %v261 = vunpack.c.l.b16 %v225
      %v262 = vunpack.c.l.b16 %v226
      %v263 = vunpack.c.l.b16 %v227
      %v264 = vunpack.c.l.b16 %v228
      %v265 = vunpack.c.l.b16 %v229
      %v266 = vunpack.c.l.b16 %v230
      %v267 = vunpack.c.l.b16 %v231
      %v268 = vunpack.c.l.b16 %v232
      %v269 = vunpack.c.l.b16 %v233
      %v270 = vunpack.c.l.b16 %v234
      %v271 = vunpack.c.l.b16 %v235
      %v272 = vunpack.c.l.b16 %v236
      %v273 = vunpack.c.l.b16 %v237
      %v274 = vunpack.c.l.b16 %v238
      %v275 = vunpack.c.l.b16 %v239
      %v276 = vunpack.c.l.b16 %v240
      %v277 = vpack.c.b16 %v262, %v261
      %v278 = vpack.c.b16 %v264, %v263
      %v279 = vpack.c.b16 %v266, %v265
      %v280 = vpack.c.b16 %v268, %v267
      %v281 = vpack.c.b16 %v270, %v269
      %v282 = vpack.c.b16 %v272, %v271
      %v283 = vpack.c.b16 %v274, %v273
      %v284 = vpack.c.b16 %v276, %v275
      %293 = vmatpush.bf16.xpose.msra.mxu0 %v284
      %294 = vmatpush.bf16.xpose.msra.mxu0 %v283
      %295 = vmatpush.bf16.xpose.msra.mxu0 %v282
      %296 = vmatpush.bf16.xpose.msra.mxu0 %v281
      %297 = vmatpush.bf16.xpose.msra.mxu0 %v280
      %298 = vmatpush.bf16.xpose.msra.mxu0 %v279
      %299 = vmatpush.bf16.xpose.msra.mxu0 %v278
      %300 = vmatpush.bf16.xpose.msra.mxu0 %v277
      %301 = vmatmul.bf16.gmra.mxu0 %v224
      %v302 = vpop.f32.mrf.mxu0
      %v303 = vadd.f32 %v243, %v302
      %v304 = vpop.f32.mrf.mxu0
      %305 = vdwg.mxu0
      %v306 = vtanh.pop %v303
      %v307 = vpack.c.bf16 %v306, %v306
      %v308 = vld [vmem:[%s3] sm:$0xf]
      %v309 = vld [vmem:[%s3 + $0x4] sm:$0xf]
      %v310 = vld [vmem:[%s3 + $0x8] sm:$0xf]
      %v311 = vld [vmem:[%s3 + $0xc] sm:$0xf]
      %v312 = vld [vmem:[%s3 + $0x10] sm:$0xf]
      %v313 = vld [vmem:[%s3 + $0x14] sm:$0xf]
      %v314 = vld [vmem:[%s3 + $0x18] sm:$0xf]
      %v315 = vld [vmem:[%s3 + $0x1c] sm:$0xf]
      %v316 = vld [vmem:[%s3 + $0x20] sm:$0xf]
      %v317 = vld [vmem:[%s3 + $0x24] sm:$0xf]
      %v318 = vld [vmem:[%s3 + $0x28] sm:$0xf]
      %v319 = vld [vmem:[%s3 + $0x2c] sm:$0xf]
      %v320 = vld [vmem:[%s3 + $0x30] sm:$0xf]
      %v321 = vld [vmem:[%s3 + $0x34] sm:$0xf]
      %v322 = vld [vmem:[%s3 + $0x38] sm:$0xf]
      %v323 = vld [vmem:[%s3 + $0x3c] sm:$0xf]
      %v324 = vld [vmem:[%s4] sm:$0x1]
      %v326 = vperm.slane %v324, 0
      %v344 = vunpack.c.l.b16 %v308
      %v345 = vunpack.c.l.b16 %v309
      %v346 = vunpack.c.l.b16 %v310
      %v347 = vunpack.c.l.b16 %v311
      %v348 = vunpack.c.l.b16 %v312
      %v349 = vunpack.c.l.b16 %v313
      %v350 = vunpack.c.l.b16 %v314
      %v351 = vunpack.c.l.b16 %v315
      %v352 = vunpack.c.l.b16 %v316
      %v353 = vunpack.c.l.b16 %v317
      %v354 = vunpack.c.l.b16 %v318
      %v355 = vunpack.c.l.b16 %v319
      %v356 = vunpack.c.l.b16 %v320
      %v357 = vunpack.c.l.b16 %v321
      %v358 = vunpack.c.l.b16 %v322
      %v359 = vunpack.c.l.b16 %v323
      %v360 = vpack.c.b16 %v345, %v344
      %v361 = vpack.c.b16 %v347, %v346
      %v362 = vpack.c.b16 %v349, %v348
      %v363 = vpack.c.b16 %v351, %v350
      %v364 = vpack.c.b16 %v353, %v352
      %v365 = vpack.c.b16 %v355, %v354
      %v366 = vpack.c.b16 %v357, %v356
      %v367 = vpack.c.b16 %v359, %v358
      %376 = vmatpush.bf16.xpose.msra.mxu0 %v367
      %377 = vmatpush.bf16.xpose.msra.mxu0 %v366
      %378 = vmatpush.bf16.xpose.msra.mxu0 %v365
      %379 = vmatpush.bf16.xpose.msra.mxu0 %v364
      %380 = vmatpush.bf16.xpose.msra.mxu0 %v363
      %381 = vmatpush.bf16.xpose.msra.mxu0 %v362
      %382 = vmatpush.bf16.xpose.msra.mxu0 %v361
      %383 = vmatpush.bf16.xpose.msra.mxu0 %v360
      %384 = vmatmul.bf16.gmra.mxu0 %v307
      %v385 = vpop.f32.mrf.mxu0
      %v386 = vadd.f32 %v326, %v385
      %v387 = vpop.f32.mrf.mxu0
      %388 = vdwg.mxu0
      %389 = vst [vmem:[%s222] sm:$0xff] %v386
      %p390 = scmp.lt.s32.totalorder %s16, 3
      %s391 = scalar_select %p390, %s16, 3
      %s392 = smul.addr %s391, 8
      %s393 = scalar_lea.vmem %s5, %s392
      // Predicated region
      $region41: #{roberta_classification_head.1} parent=39 // pred_check
        %p394 = pneg %p144
      $region42: #{roberta_classification_head.1} parent=39 // pred_check_branch
        %396 = sbr.rel (%p394) target = $region44
      $region43: #{roberta_classification_head.1} parent=39 // pred_region
        _
      $region44: #{roberta_classification_head.1} parent=39 // pred_fallthru
        _
    $region40: #{roberta_classification_head.1} parent=5 // pred_fallthru
      _
    %p397 = scmp.le.s32.totalorder 2, %s11
    // Predicated region
    $region45: #{roberta_classification_head.1} parent=5 // pred_check
      %p398 = pneg %p397
    $region46: #{roberta_classification_head.1} parent=5 // pred_check_branch
      %400 = sbr.rel (%p398) target = $region48
    $region47: #{roberta_classification_head.1} parent=5 // pred_region
      %s401 = ssub.s32 %s11, 2
      // Predicated region
      $region49: #{roberta_classification_head.1} parent=47 // pred_check
        %p402 = pneg %p150
      $region50: #{roberta_classification_head.1} parent=47 // pred_check_branch
        %404 = sbr.rel (%p402) target = $region52
      $region51: #{roberta_classification_head.1} parent=47 // pred_region
        %p405 = scmp.lt.s32.totalorder %s17, 3
        %s406 = scalar_select %p405, %s17, 3
        %s407 = smul.addr %s406, 8
        %s408 = scalar_lea.vmem %s5, %s407
      $region52: #{roberta_classification_head.1} parent=47 // pred_fallthru
        _
    $region48: #{roberta_classification_head.1} parent=5 // pred_fallthru
      _
  $region6: #{roberta_classification_head.1} parent=0 // loop_footer
    %s15 = sadd.s32 1, %s11
  $region7: #{roberta_classification_head.1} parent=0 // loop_footer_branch
    %10 = sbr.rel target = $region3
  $region8: #{roberta_classification_head.1} parent=0 // loop_exit
    _

</llo_original>
